<compile_context>
chip_gen: v6e
topology: v6e:2x2x1
jax: 0.10.0
libtpu: 0.0.40
codegen_flags: <defaults>
</compile_context>

<pallas_src>
import functools

import jax
import jax.numpy as jnp
from jax import lax
from jax.experimental import pallas as pl
from jax.experimental.pallas import tpu as pltpu


def _wce_kernel(logits_ref, targets_ref, weight_ref,
                num_ref, den_ref, num_acc, den_acc, *, s_valid):
    """One (batch n, spatial tile j) grid step.

    logits block  : (1, C, TILE_S)  classes on sublanes, spatial on lanes
    targets block : (1, 1, TILE_S)  lane-dense int32 class indices
    weight block  : (C, 1)          per-class weights
    """
    j = pl.program_id(1)
    nj = pl.num_programs(1)

    @pl.when(j == 0)
    def _():
        num_acc[...] = jnp.zeros_like(num_acc)
        den_acc[...] = jnp.zeros_like(den_acc)

    x = logits_ref[0].astype(jnp.float32)      # (C, TILE_S), upcast in-kernel
    t = targets_ref[0]                          # (1, TILE_S) int32
    w = weight_ref[...].astype(jnp.float32)     # (C, 1)

    c, tile_s = x.shape

    # Tail masking by absolute spatial index: lanes >= s_valid hold garbage
    # (no wrapper-side padding), so exclude them from both sums. Keep the
    # explicit where() on nll too, since OOB logits may be Inf/NaN garbage and
    # 0 * NaN would otherwise poison the accumulator.
    col = lax.broadcasted_iota(jnp.int32, (1, tile_s), 1) + j * tile_s
    valid = col < s_valid                       # (1, TILE_S) bool

    # Numerically stable logsumexp over the class (sublane) axis.
    x_max = jnp.max(x, axis=0, keepdims=True)                        # (1, TILE_S)
    lse = x_max + jnp.log(jnp.sum(jnp.exp(x - x_max), axis=0, keepdims=True))

    # One-hot gather of x[t] and weight[t] along the (tiny) class axis.
    cls = lax.broadcasted_iota(jnp.int32, (c, tile_s), 0)
    onehot = (cls == t).astype(jnp.float32)                          # (C, TILE_S)
    x_t = jnp.sum(x * onehot, axis=0, keepdims=True)                 # (1, TILE_S)
    w_t = jnp.sum(w * onehot, axis=0, keepdims=True)                 # (1, TILE_S)

    w_t = jnp.where(valid, w_t, 0.0)
    nll = jnp.where(valid, w_t * (lse - x_t), 0.0)

    # Per-lane accumulation (pure VPU adds); cross-lane reduce deferred to the
    # last tile so the expensive XLU reduction happens once per batch row.
    num_acc[...] += nll
    den_acc[...] += w_t

    @pl.when(j == nj - 1)
    def _():
        num_ref[...] = jnp.sum(num_acc[...]).reshape(1, 1, 1)
        den_ref[...] = jnp.sum(den_acc[...]).reshape(1, 1, 1)


@functools.partial(jax.jit, static_argnames=("tile_s",))
def weighted_cross_entropy_loss(predictions, targets, class_weights,
                                tile_s=32768):
    """Pallas implementation of nn.CrossEntropyLoss(weight=class_weights)."""
    c = predictions.shape[1]

    if predictions.ndim > 2:
        # NCHW...: spatial dims are already contiguous per channel, so
        # (N, C, H, W) -> (N, C, S) is a free reshape (no transpose, no HBM pass).
        n = predictions.shape[0]
        logits = predictions.reshape(n, c, -1)
        tgt = targets.reshape(n, 1, -1).astype(jnp.int32)
    else:
        # (M, C) logits / (M,) targets. The transpose costs one XLA pass; this
        # path is off-spec for this module (segmentation-style NCHW inputs).
        n = 1
        logits = predictions.T.reshape(1, c, -1)
        tgt = targets.reshape(1, 1, -1).astype(jnp.int32)

    s = logits.shape[2]

    # Lane-dense spatial tile, multiple of 128. With C=4 f32 this is only
    # 16*tile bytes, so even 32768 lanes is ~0.5 MiB per (double-buffered)
    # logits block -- comfortably within scoped VMEM on v5e/v6e/v7x.
    # TODO(synk): for large-C reuse (vocab-sized CE), size the tile against
    # vmem_limit_bytes explicitly (v7x has only 64 MiB physical VMEM).
    tile = min(tile_s, s)
    tile = ((tile + 127) // 128) * 128
    grid = (n, pl.cdiv(s, tile))

    w = class_weights.astype(jnp.float32).reshape(c, 1)

    num, den = pl.pallas_call(
        functools.partial(_wce_kernel, s_valid=s),
        out_shape=(
            jax.ShapeDtypeStruct((n, 1, 1), jnp.float32),
            jax.ShapeDtypeStruct((n, 1, 1), jnp.float32),
        ),
        grid=grid,
        in_specs=[
            pl.BlockSpec((1, c, tile), lambda i, j: (i, 0, j)),
            pl.BlockSpec((1, 1, tile), lambda i, j: (i, 0, j)),
            pl.BlockSpec((c, 1), lambda i, j: (0, 0)),
        ],
        out_specs=(
            pl.BlockSpec((1, 1, 1), lambda i, j: (i, 0, 0)),
            pl.BlockSpec((1, 1, 1), lambda i, j: (i, 0, 0)),
        ),
        scratch_shapes=[
            pltpu.VMEM((1, tile), jnp.float32),   # per-lane numerator partials
            pltpu.VMEM((1, tile), jnp.float32),   # per-lane weight partials
        ],
        compiler_params=pltpu.CompilerParams(
            # batch axis parallel (megacore / v7x 2-TC), spatial axis is the
            # serial reduction feeding the per-batch accumulators.
            dimension_semantics=("parallel", "arbitrary")),
    )(logits, tgt, w)

    # Reduce per-batch partials; weighted mean (PyTorch 'mean' with weights).
    return jnp.sum(num) / jnp.sum(den)


def _reference_loss(predictions, targets, class_weights):
    """Plain-JAX reference matching torch CrossEntropyLoss(weight=w)."""
    c = predictions.shape[1]
    perm = (0,) + tuple(range(2, predictions.ndim)) + (1,)
    x = jnp.transpose(predictions, perm).reshape(-1, c).astype(jnp.float32)
    t = targets.reshape(-1).astype(jnp.int32)
    lse = jax.nn.logsumexp(x, axis=-1)
    x_t = jnp.take_along_axis(x, t[:, None], axis=-1)[:, 0]
    w_t = class_weights[t]
    return jnp.sum(w_t * (lse - x_t)) / jnp.sum(w_t)


if __name__ == "__main__":
    # hyp['num_classes']
    num_classes = 4

    # Deterministic "module parameters": per-class weights, weight[0] = 0.02
    da_w = jnp.ones((num_classes,), dtype=jnp.float32).at[0].set(0.02)

    key = jax.random.PRNGKey(0)
    k_pred, k_tgt = jax.random.split(key)
    # predictions: NCHW logits (segmentation-style), targets: class indices
    predictions = jax.random.normal(k_pred, (2, num_classes, 16, 16),
                                    dtype=jnp.float32)
    targets = jax.random.randint(k_tgt, (2, 16, 16), 0, num_classes,
                                 dtype=jnp.int32)

    loss = weighted_cross_entropy_loss(predictions, targets, da_w)
    jax.block_until_ready(loss)

    ref = _reference_loss(predictions, targets, da_w)
    assert jnp.allclose(loss, ref, rtol=1e-5, atol=1e-5), (loss, ref)

    print("KERNEL_OK")
</pallas_src>

<mosaic_0001>
module attributes {stable_mosaic.version = 11 : i64} {
  func.func @_wce_kernel(%arg0: i32, %arg1: i32, %arg2: memref<1x4x256xf32, #tpu.memory_space<vmem>>, %arg3: memref<1x1x256xi32, #tpu.memory_space<vmem>>, %arg4: memref<4x1xf32, #tpu.memory_space<vmem>>, %arg5: memref<1x1x1xf32, #tpu.memory_space<vmem>>, %arg6: memref<1x1x1xf32, #tpu.memory_space<vmem>>, %arg7: memref<1x256xf32, #tpu.memory_space<vmem>>, %arg8: memref<1x256xf32, #tpu.memory_space<vmem>>) attributes {dimension_semantics = [#tpu.dimension_semantics<parallel>, #tpu.dimension_semantics<arbitrary>], iteration_bounds = array<i64: 2, 1>, scalar_prefetch = 0 : i64, scratch_operands = 2 : i64, tpu.core_type = #tpu.core_type<tc>, window_params = [{transform_indices = @transform_0, window_bounds = array<i64: 1, 4, 256>}, {transform_indices = @transform_1, window_bounds = array<i64: 1, 1, 256>}, {pipeline_mode = #tpu.pipeline_mode<synchronous>, transform_indices = @transform_2, window_bounds = array<i64: 4, 1>}, {transform_indices = @transform_3, window_bounds = array<i64: 1, 1, 1>}, {transform_indices = @transform_4, window_bounds = array<i64: 1, 1, 1>}]} {
    %c0_i32 = arith.constant 0 : i32
    %0 = arith.cmpi eq, %arg1, %c0_i32 : i32
    %1 = arith.extui %0 : i1 to i32
    %c0_i32_0 = arith.constant 0 : i32
    %2 = arith.cmpi ne, %1, %c0_i32_0 : i32
    scf.if %2 {
      %cst_24 = arith.constant 0.000000e+00 : f32
      %50 = vector.broadcast %cst_24 : f32 to vector<1x256xf32>
      %c0_25 = arith.constant 0 : index
      %c0_26 = arith.constant 0 : index
      %51 = vector.load %arg7[%c0_25, %c0_26] : memref<1x256xf32, #tpu.memory_space<vmem>>, vector<1x256xf32>
      tpu.vector_store %arg7[%c0_25, %c0_26], %50 {strides = array<i32>} : memref<1x256xf32, #tpu.memory_space<vmem>>, vector<1x256xf32>,
      %cst_27 = arith.constant 0.000000e+00 : f32
      %52 = vector.broadcast %cst_27 : f32 to vector<1x256xf32>
      %c0_28 = arith.constant 0 : index
      %c0_29 = arith.constant 0 : index
      %53 = vector.load %arg8[%c0_28, %c0_29] : memref<1x256xf32, #tpu.memory_space<vmem>>, vector<1x256xf32>
      tpu.vector_store %arg8[%c0_28, %c0_29], %52 {strides = array<i32>} : memref<1x256xf32, #tpu.memory_space<vmem>>, vector<1x256xf32>,
    } else {
    }
    %c0 = arith.constant 0 : index
    %c0_1 = arith.constant 0 : index
    %c0_2 = arith.constant 0 : index
    %3 = vector.load %arg2[%c0, %c0_1, %c0_2] : memref<1x4x256xf32, #tpu.memory_space<vmem>>, vector<1x4x256xf32>
    %4 = vector.shape_cast %3 : vector<1x4x256xf32> to vector<4x256xf32>
    %c0_3 = arith.constant 0 : index
    %c0_4 = arith.constant 0 : index
    %c0_5 = arith.constant 0 : index
    %5 = vector.load %arg3[%c0_3, %c0_4, %c0_5] : memref<1x1x256xi32, #tpu.memory_space<vmem>>, vector<1x1x256xi32>
    %6 = vector.shape_cast %5 : vector<1x1x256xi32> to vector<1x256xi32>
    %c0_6 = arith.constant 0 : index
    %c0_7 = arith.constant 0 : index
    %7 = vector.load %arg4[%c0_6, %c0_7] : memref<4x1xf32, #tpu.memory_space<vmem>>, vector<4x1xf32>
    %8 = tpu.iota {dimensions = array<i32: 1>} : vector<1x256xi32>
    %c256_i32 = arith.constant 256 : i32
    %9 = arith.muli %arg1, %c256_i32 : i32
    %10 = vector.broadcast %9 : i32 to vector<1x256xi32>
    %11 = arith.addi %8, %10 : vector<1x256xi32>
    %c256_i32_8 = arith.constant 256 : i32
    %12 = vector.broadcast %c256_i32_8 : i32 to vector<1x256xi32>
    %13 = arith.cmpi slt, %11, %12 : vector<1x256xi32>
    %cst = arith.constant dense<0xFF800000> : vector<256xf32>
    %14 = vector.multi_reduction <maximumf>, %4, %cst [0] : vector<4x256xf32> to vector<256xf32>
    %15 = vector.shape_cast %14 : vector<256xf32> to vector<1x256xf32>
    %16 = vector.broadcast %15 : vector<1x256xf32> to vector<4x256xf32>
    %17 = arith.subf %4, %16 : vector<4x256xf32>
    %18 = math.exp %17 : vector<4x256xf32>
    %cst_9 = arith.constant dense<0.000000e+00> : vector<256xf32>
    %19 = vector.multi_reduction <add>, %18, %cst_9 [0] : vector<4x256xf32> to vector<256xf32>
    %20 = vector.shape_cast %19 : vector<256xf32> to vector<1x256xf32>
    %21 = math.log %20 : vector<1x256xf32>
    %22 = arith.addf %15, %21 : vector<1x256xf32>
    %23 = tpu.iota {dimensions = array<i32: 0>} : vector<4x256xi32>
    %24 = vector.broadcast %6 : vector<1x256xi32> to vector<4x256xi32>
    %25 = arith.cmpi eq, %23, %24 : vector<4x256xi32>
    %26 = arith.extui %25 : vector<4x256xi1> to vector<4x256xi32>
    %27 = arith.sitofp %26 : vector<4x256xi32> to vector<4x256xf32>
    %28 = arith.mulf %4, %27 : vector<4x256xf32>
    %cst_10 = arith.constant dense<0.000000e+00> : vector<256xf32>
    %29 = vector.multi_reduction <add>, %28, %cst_10 [0] : vector<4x256xf32> to vector<256xf32>
    %30 = vector.shape_cast %29 : vector<256xf32> to vector<1x256xf32>
    %31 = vector.broadcast %7 : vector<4x1xf32> to vector<4x256xf32>
    %32 = arith.mulf %31, %27 : vector<4x256xf32>
    %cst_11 = arith.constant dense<0.000000e+00> : vector<256xf32>
    %33 = vector.multi_reduction <add>, %32, %cst_11 [0] : vector<4x256xf32> to vector<256xf32>
    %34 = vector.shape_cast %33 : vector<256xf32> to vector<1x256xf32>
    %cst_12 = arith.constant 0.000000e+00 : f32
    %35 = vector.broadcast %cst_12 : f32 to vector<1x256xf32>
    %36 = arith.select %13, %34, %35 : vector<1x256xi1>, vector<1x256xf32>
    %37 = arith.subf %22, %30 : vector<1x256xf32>
    %38 = arith.mulf %36, %37 : vector<1x256xf32>
    %cst_13 = arith.constant 0.000000e+00 : f32
    %39 = vector.broadcast %cst_13 : f32 to vector<1x256xf32>
    %40 = arith.select %13, %38, %39 : vector<1x256xi1>, vector<1x256xf32>
    %c0_14 = arith.constant 0 : index
    %c0_15 = arith.constant 0 : index
    %41 = vector.load %arg7[%c0_14, %c0_15] : memref<1x256xf32, #tpu.memory_space<vmem>>, vector<1x256xf32>
    %42 = arith.addf %41, %40 : vector<1x256xf32>
    %c0_16 = arith.constant 0 : index
    %c0_17 = arith.constant 0 : index
    %43 = vector.load %arg7[%c0_16, %c0_17] : memref<1x256xf32, #tpu.memory_space<vmem>>, vector<1x256xf32>
    tpu.vector_store %arg7[%c0_16, %c0_17], %42 {strides = array<i32>} : memref<1x256xf32, #tpu.memory_space<vmem>>, vector<1x256xf32>,
    %c0_18 = arith.constant 0 : index
    %c0_19 = arith.constant 0 : index
    %44 = vector.load %arg8[%c0_18, %c0_19] : memref<1x256xf32, #tpu.memory_space<vmem>>, vector<1x256xf32>
    %45 = arith.addf %44, %36 : vector<1x256xf32>
    %c0_20 = arith.constant 0 : index
    %c0_21 = arith.constant 0 : index
    %46 = vector.load %arg8[%c0_20, %c0_21] : memref<1x256xf32, #tpu.memory_space<vmem>>, vector<1x256xf32>
    tpu.vector_store %arg8[%c0_20, %c0_21], %45 {strides = array<i32>} : memref<1x256xf32, #tpu.memory_space<vmem>>, vector<1x256xf32>,
    %c0_i32_22 = arith.constant 0 : i32
    %47 = arith.cmpi eq, %arg1, %c0_i32_22 : i32
    %48 = arith.extui %47 : i1 to i32
    %c0_i32_23 = arith.constant 0 : i32
    %49 = arith.cmpi ne, %48, %c0_i32_23 : i32
    scf.if %49 {
      %c0_24 = arith.constant 0 : index
      %c0_25 = arith.constant 0 : index
      %50 = vector.load %arg7[%c0_24, %c0_25] : memref<1x256xf32, #tpu.memory_space<vmem>>, vector<1x256xf32>
      %51 = vector.shape_cast %50 : vector<1x256xf32> to vector<1x1x256xf32>
      %cst_26 = arith.constant dense<0.000000e+00> : vector<1xf32>
      %52 = vector.multi_reduction <add>, %51, %cst_26 [1, 2] : vector<1x1x256xf32> to vector<1xf32>
      %53 = vector.shape_cast %52 : vector<1xf32> to vector<1x1x1xf32>
      %54 = vector.extract %53[0, 0, 0] : f32 from vector<1x1x1xf32>
      %55 = vector.broadcast %54 : f32 to vector<1x1x1xf32>
      %c0_27 = arith.constant 0 : index
      %c0_28 = arith.constant 0 : index
      %c0_29 = arith.constant 0 : index
      %56 = vector.load %arg5[%c0_27, %c0_28, %c0_29] : memref<1x1x1xf32, #tpu.memory_space<vmem>>, vector<1x1x1xf32>
      tpu.vector_store %arg5[%c0_27, %c0_28, %c0_29], %55 {strides = array<i32>} : memref<1x1x1xf32, #tpu.memory_space<vmem>>, vector<1x1x1xf32>,
      %c0_30 = arith.constant 0 : index
      %c0_31 = arith.constant 0 : index
      %57 = vector.load %arg8[%c0_30, %c0_31] : memref<1x256xf32, #tpu.memory_space<vmem>>, vector<1x256xf32>
      %58 = vector.shape_cast %57 : vector<1x256xf32> to vector<1x1x256xf32>
      %cst_32 = arith.constant dense<0.000000e+00> : vector<1xf32>
      %59 = vector.multi_reduction <add>, %58, %cst_32 [1, 2] : vector<1x1x256xf32> to vector<1xf32>
      %60 = vector.shape_cast %59 : vector<1xf32> to vector<1x1x1xf32>
      %61 = vector.extract %60[0, 0, 0] : f32 from vector<1x1x1xf32>
      %62 = vector.broadcast %61 : f32 to vector<1x1x1xf32>
      %c0_33 = arith.constant 0 : index
      %c0_34 = arith.constant 0 : index
      %c0_35 = arith.constant 0 : index
      %63 = vector.load %arg6[%c0_33, %c0_34, %c0_35] : memref<1x1x1xf32, #tpu.memory_space<vmem>>, vector<1x1x1xf32>
      tpu.vector_store %arg6[%c0_33, %c0_34, %c0_35], %62 {strides = array<i32>} : memref<1x1x1xf32, #tpu.memory_space<vmem>>, vector<1x1x1xf32>,
    } else {
    }
    return
  }
  func.func @transform_0(%arg0: i32, %arg1: i32) -> (i32, i32, i32) {
    %c0_i32 = arith.constant 0 : i32
    %c0_i32_0 = arith.constant 0 : i32
    return %arg0, %c0_i32, %arg1 : i32, i32, i32
  }
  func.func @transform_1(%arg0: i32, %arg1: i32) -> (i32, i32, i32) {
    %c0_i32 = arith.constant 0 : i32
    %c0_i32_0 = arith.constant 0 : i32
    return %arg0, %c0_i32, %arg1 : i32, i32, i32
  }
  func.func @transform_2(%arg0: i32, %arg1: i32) -> (i32, i32) {
    %c0_i32 = arith.constant 0 : i32
    %c0_i32_0 = arith.constant 0 : i32
    %c0_i32_1 = arith.constant 0 : i32
    return %c0_i32, %c0_i32_0 : i32, i32
  }
  func.func @transform_3(%arg0: i32, %arg1: i32) -> (i32, i32, i32) {
    %c0_i32 = arith.constant 0 : i32
    %c0_i32_0 = arith.constant 0 : i32
    %c0_i32_1 = arith.constant 0 : i32
    return %arg0, %c0_i32, %c0_i32_0 : i32, i32, i32
  }
  func.func @transform_4(%arg0: i32, %arg1: i32) -> (i32, i32, i32) {
    %c0_i32 = arith.constant 0 : i32
    %c0_i32_0 = arith.constant 0 : i32
    %c0_i32_1 = arith.constant 0 : i32
    return %arg0, %c0_i32, %c0_i32_0 : i32, i32, i32
  }
}

</mosaic_0001>

<llo_original>
// kernel: weighted_cross_entropy_loss.1
$region0: #{weighted_cross_entropy_loss.1}
  #allocation0 [shape = 'u32[]', space=smem, size = 0x4, offset = 0x4, fixed_abs, tag = 'smem constant byte address 0x4 - core index']
  #allocation1 [shape = 'u32[144,128]{1,0:T(1,128)}', space=vmem, size = 0x12000, scoped, tag = 'internal scratch']
  #allocation2 [shape = 'f32[1,256]{1,0:T(1,128)}', space=vmem, size = 0x400, scoped, tag = 'scratch operand']
  #allocation3 [shape = 'f32[1,256]{1,0:T(1,128)}', space=vmem, size = 0x400, scoped, tag = 'scratch operand']
  %s0 = inlined_call_operand.vmem [shape: f32[2,4,256], index: 0, kind: input, shape index: {}]
  %s1 = inlined_call_operand.vmem [shape: s32[2,1,256], index: 1, kind: input, shape index: {}]
  %s2 = inlined_call_operand.vmem [shape: f32[4,1], index: 2, kind: input, shape index: {}]
  %s3 = inlined_call_operand.vmem [shape: f32[2,1,1], index: 3, kind: output, shape index: {0}]
  %s4 = inlined_call_operand.vmem [shape: f32[2,1,1], index: 4, kind: output, shape index: {1}]
  %5 = xla_tuple %s3, %s4
  %s6 = sld [smem:[#allocation0]]
  $region61: #{weighted_cross_entropy_loss.1} parent=0
    _
  %s8 = ssub.s32 1, %s6
  %s9 = scalar_select 0, %s8, %s6
  loop: start=0, step=1, limit=4
  $region2: #{weighted_cross_entropy_loss.1} parent=0 // loop_pre_header
    _
  $region3: #{weighted_cross_entropy_loss.1} parent=0 // loop_header
    %s11 = sphi 0, %s15
    %p12 = scmp.ge.s32.totalorder %s11, 4
    %s18 = sphi 0, %s30
    %s19 = sphi 0, %s26
    %s20 = sphi 0, %s18
    %s21 = sphi 0, %s19
    %s22 = sphi 0, %s20
    %s23 = sphi 0, %s21
    %s35 = sphi 0, %s37
    %s38 = sphi 0, %s35
    %s39 = sphi 0, %s38
    %s55 = sphi 0, %s39
    %s63 = sphi 0, %s65
    %s66 = sphi 0, %s63
    %s67 = sphi 0, %s66
    %s83 = sphi 0, %s67
    %s87 = sphi 0, %s87
    %s89 = sphi 0, %s87
    %s90 = sphi 0, %s89
    %s104 = sphi 0, %s90
    %s110 = sphi 0, %s112
    %s113 = sphi 0, %s110
    %s114 = sphi 0, %s113
    %s130 = sphi 0, %s114
    %s136 = sphi 0, %s138
    %s139 = sphi 0, %s136
    %s140 = sphi 0, %s139
    %s156 = sphi 0, %s140
  $region4: #{weighted_cross_entropy_loss.1} parent=0 // loop_header_branch
    %14 = sbr.rel (%p12) target = $region8
  $region5: #{weighted_cross_entropy_loss.1} parent=0 // loop_body
    %s16 = ssub.s32 %s11, 1
    %s17 = ssub.s32 %s11, 2
    %s24 = sadd.s32 1, %s19
    %p25 = scmp.ge.s32.totalorder %s24, 1
    %s26 = scalar_select %p25, 0, %s24
    %s27 = sadd.s32 1, %s18
    %s28 = scalar_select %p25, %s27, %s18
    %p29 = scmp.ge.s32.totalorder %s28, 2
    %s30 = scalar_select %p29, 0, %s28
    %s31 = ssub.s32 %s18, %s30
    %s32 = ssub.s32 %s19, %s26
    %s33 = sor.u32 %s31, %s32
    %p34 = scmp.eq.s32.totalorder %s33, 0
    %s36 = sadd.s32 %s35, 1
    %s37 = scalar_select %p34, %s35, %s36
    %p40 = pneg %p34
    %p41 = scmp.eq.s32.totalorder %s11, 1
    %p42 = por %p40, %p41
    %p43 = scmp.ne.s32.totalorder %s35, %s38
    %p44 = scmp.eq.s32.totalorder %s11, 0
    %p45 = por %p43, %p44
    %p46 = scmp.ne.s32.totalorder %s35, %s38
    %p47 = scmp.eq.s32.totalorder %s16, 1
    %p48 = por %p46, %p47
    %p49 = scmp.ne.s32.totalorder %s38, %s39
    %p50 = scmp.eq.s32.totalorder %s16, 0
    %p51 = por %p49, %p50
    %p52 = scmp.ne.s32.totalorder %s38, %s39
    %p53 = scmp.eq.s32.totalorder %s17, 1
    %p54 = por %p52, %p53
    %p56 = scmp.ne.s32.totalorder %s39, %s55
    %p57 = scmp.eq.s32.totalorder %s17, 0
    %p58 = por %p56, %p57
    %s59 = ssub.s32 %s18, %s30
    %s60 = ssub.s32 %s19, %s26
    %s61 = sor.u32 %s59, %s60
    %p62 = scmp.eq.s32.totalorder %s61, 0
    %s64 = sadd.s32 %s63, 1
    %s65 = scalar_select %p62, %s63, %s64
    %p68 = pneg %p62
    %p69 = scmp.eq.s32.totalorder %s11, 1
    %p70 = por %p68, %p69
    %p71 = scmp.ne.s32.totalorder %s63, %s66
    %p72 = scmp.eq.s32.totalorder %s11, 0
    %p73 = por %p71, %p72
    %p74 = scmp.ne.s32.totalorder %s63, %s66
    %p75 = scmp.eq.s32.totalorder %s16, 1
    %p76 = por %p74, %p75
    %p77 = scmp.ne.s32.totalorder %s66, %s67
    %p78 = scmp.eq.s32.totalorder %s16, 0
    %p79 = por %p77, %p78
    %p80 = scmp.ne.s32.totalorder %s66, %s67
    %p81 = scmp.eq.s32.totalorder %s17, 1
    %p82 = por %p80, %p81
    %p84 = scmp.ne.s32.totalorder %s67, %s83
    %p85 = scmp.eq.s32.totalorder %s17, 0
    %p86 = por %p84, %p85
    %s88 = sadd.s32 %s87, 1
    %p91 = scmp.eq.s32.totalorder %s11, 1
    %p92 = scmp.ne.s32.totalorder %s87, %s89
    %p93 = scmp.eq.s32.totalorder %s11, 0
    %p94 = por %p92, %p93
    %p95 = scmp.ne.s32.totalorder %s87, %s89
    %p96 = scmp.eq.s32.totalorder %s16, 1
    %p97 = por %p95, %p96
    %p98 = scmp.ne.s32.totalorder %s89, %s90
    %p99 = scmp.eq.s32.totalorder %s16, 0
    %p100 = por %p98, %p99
    %p101 = scmp.ne.s32.totalorder %s89, %s90
    %p102 = scmp.eq.s32.totalorder %s17, 1
    %p103 = por %p101, %p102
    %p105 = scmp.ne.s32.totalorder %s90, %s104
    %p106 = scmp.eq.s32.totalorder %s17, 0
    %p107 = por %p105, %p106
    %s108 = ssub.s32 %s18, %s30
    %p109 = scmp.eq.s32.totalorder %s108, 0
    %s111 = sadd.s32 %s110, 1
    %s112 = scalar_select %p109, %s110, %s111
    %p115 = pneg %p109
    %p116 = scmp.eq.s32.totalorder %s11, 1
    %p117 = por %p115, %p116
    %p118 = scmp.ne.s32.totalorder %s110, %s113
    %p119 = scmp.eq.s32.totalorder %s11, 0
    %p120 = por %p118, %p119
    %p121 = scmp.ne.s32.totalorder %s110, %s113
    %p122 = scmp.eq.s32.totalorder %s16, 1
    %p123 = por %p121, %p122
    %p124 = scmp.ne.s32.totalorder %s113, %s114
    %p125 = scmp.eq.s32.totalorder %s16, 0
    %p126 = por %p124, %p125
    %p127 = scmp.ne.s32.totalorder %s113, %s114
    %p128 = scmp.eq.s32.totalorder %s17, 1
    %p129 = por %p127, %p128
    %p131 = scmp.ne.s32.totalorder %s114, %s130
    %p132 = scmp.eq.s32.totalorder %s17, 0
    %p133 = por %p131, %p132
    %s134 = ssub.s32 %s18, %s30
    %p135 = scmp.eq.s32.totalorder %s134, 0
    %s137 = sadd.s32 %s136, 1
    %s138 = scalar_select %p135, %s136, %s137
    %p141 = pneg %p135
    %p142 = scmp.eq.s32.totalorder %s11, 1
    %p143 = por %p141, %p142
    %p144 = scmp.ne.s32.totalorder %s136, %s139
    %p145 = scmp.eq.s32.totalorder %s11, 0
    %p146 = por %p144, %p145
    %p147 = scmp.ne.s32.totalorder %s136, %s139
    %p148 = scmp.eq.s32.totalorder %s16, 1
    %p149 = por %p147, %p148
    %p150 = scmp.ne.s32.totalorder %s139, %s140
    %p151 = scmp.eq.s32.totalorder %s16, 0
    %p152 = por %p150, %p151
    %p153 = scmp.ne.s32.totalorder %s139, %s140
    %p154 = scmp.eq.s32.totalorder %s17, 1
    %p155 = por %p153, %p154
    %p157 = scmp.ne.s32.totalorder %s140, %s156
    %p158 = scmp.eq.s32.totalorder %s17, 0
    %p159 = por %p157, %p158
    %p160 = scmp.le.s32.totalorder 1, %s11
    %p161 = scmp.lt.s32.totalorder %s11, 3
    %p162 = pnand %p160, %p161
    %p163 = pneg %p162
    // Predicated region
    $region9: #{weighted_cross_entropy_loss.1} parent=5 // pred_check
      _
    $region10: #{weighted_cross_entropy_loss.1} parent=5 // pred_check_branch
      %165 = sbr.rel (%p162) target = $region12
    $region11: #{weighted_cross_entropy_loss.1} parent=5 // pred_region
      %s166 = ssub.s32 %s11, 1
      // Predicated region
      $region13: #{weighted_cross_entropy_loss.1} parent=11 // pred_check
        %p167 = pneg %p100
      $region14: #{weighted_cross_entropy_loss.1} parent=11 // pred_check_branch
        %169 = sbr.rel (%p167) target = $region16
      $region15: #{weighted_cross_entropy_loss.1} parent=11 // pred_region
        _
      $region16: #{weighted_cross_entropy_loss.1} parent=11 // pred_fallthru
        _
    $region12: #{weighted_cross_entropy_loss.1} parent=5 // pred_fallthru
      _
    %p170 = scmp.lt.s32.totalorder %s11, 2
    // Predicated region
    $region17: #{weighted_cross_entropy_loss.1} parent=5 // pred_check
      %p171 = pneg %p170
    $region18: #{weighted_cross_entropy_loss.1} parent=5 // pred_check_branch
      %173 = sbr.rel (%p171) target = $region20
    $region19: #{weighted_cross_entropy_loss.1} parent=5 // pred_region
      // Predicated region
      $region21: #{weighted_cross_entropy_loss.1} parent=19 // pred_check
        %p174 = pneg %p45
      $region22: #{weighted_cross_entropy_loss.1} parent=19 // pred_check_branch
        %176 = sbr.rel (%p174) target = $region24
      $region23: #{weighted_cross_entropy_loss.1} parent=19 // pred_region
        %s177 = smul.u32 2, %s19
        %p178 = scmp.lt.s32.totalorder %s18, 1
        %s179 = scalar_select %p178, %s18, 1
        %p180 = scmp.lt.s32.totalorder %s177, 1
        %s181 = scalar_select %p180, %s177, 1
        %s182 = smul.addr %s179, 2
        %s183 = sadd.s32 %s181, %s182
        %s184 = smul.addr %s183, 4
        %s185 = scalar_lea.vmem %s0, %s184
        %s186 = smul.u32 2, %s19
      $region24: #{weighted_cross_entropy_loss.1} parent=19 // pred_fallthru
        _
      // Predicated region
      $region25: #{weighted_cross_entropy_loss.1} parent=19 // pred_check
        %p187 = pneg %p73
      $region26: #{weighted_cross_entropy_loss.1} parent=19 // pred_check_branch
        %189 = sbr.rel (%p187) target = $region28
      $region27: #{weighted_cross_entropy_loss.1} parent=19 // pred_region
        %s190 = smul.u32 2, %s19
        %p191 = scmp.lt.s32.totalorder %s18, 1
        %s192 = scalar_select %p191, %s18, 1
        %p193 = scmp.lt.s32.totalorder %s190, 1
        %s194 = scalar_select %p193, %s190, 1
        %s195 = smul.addr %s192, 2
        %s196 = sadd.s32 %s194, %s195
        %s197 = scalar_lea.vmem %s1, %s196
        %s198 = smul.u32 2, %s19
      $region28: #{weighted_cross_entropy_loss.1} parent=19 // pred_fallthru
        _
    $region20: #{weighted_cross_entropy_loss.1} parent=5 // pred_fallthru
      _
    %p199 = scmp.le.s32.totalorder 1, %s11
    %p200 = scmp.lt.s32.totalorder %s11, 3
    %p201 = pnand %p199, %p200
    %p202 = pneg %p201
    // Predicated region
    $region29: #{weighted_cross_entropy_loss.1} parent=5 // pred_check
      _
    $region30: #{weighted_cross_entropy_loss.1} parent=5 // pred_check_branch
      %204 = sbr.rel (%p201) target = $region32
    $region31: #{weighted_cross_entropy_loss.1} parent=5 // pred_region
      %s205 = ssub.s32 %s11, 1
      %s206 = smul.u32 2, %s21
      %p207 = scmp.lt.s32.totalorder %s20, 1
      %s208 = scalar_select %p207, %s20, 1
      %p209 = scmp.lt.s32.totalorder %s206, 1
      %s210 = scalar_select %p209, %s206, 1
      %s211 = smul.addr %s208, 2
      %s212 = sadd.s32 %s210, %s211
      %s213 = smul.addr %s212, 4
      %s214 = scalar_lea.vmem %s0, %s213
      %p215 = pneg %p51
      %p216 = pneg %p48
      %s217 = smul.u32 2, %s21
      %p218 = scmp.lt.s32.totalorder %s20, 1
      %s219 = scalar_select %p218, %s20, 1
      %p220 = scmp.lt.s32.totalorder %s217, 1
      %s221 = scalar_select %p220, %s217, 1
      %s222 = smul.addr %s219, 2
      %s223 = sadd.s32 %s221, %s222
      %s224 = scalar_lea.vmem %s1, %s223
      %p225 = pneg %p79
      %p226 = pneg %p76
      %p227 = pneg %p100
      %p228 = pneg %p97
      %p229 = pneg %p126
      %p230 = pneg %p123
      %p231 = scmp.lt.s32.totalorder %s20, 1
      %s232 = scalar_select %p231, %s20, 1
      %s233 = scalar_lea.vmem %s3, %s232
      %p234 = pneg %p152
      %p235 = pneg %p149
      %p236 = scmp.lt.s32.totalorder %s20, 1
      %s237 = scalar_select %p236, %s20, 1
      %s238 = scalar_lea.vmem %s4, %s237
      %s239 = smul.u32 2, %s21
      %p240 = scmp.lt.s32.totalorder %s20, 1
      %s241 = scalar_select %p240, %s20, 1
      %p242 = scmp.lt.s32.totalorder %s239, 1
      %s243 = scalar_select %p242, %s239, 1
      %s244 = smul.addr %s241, 2
      %s245 = sadd.s32 %s243, %s244
      %s246 = smul.addr %s245, 4
      %s247 = scalar_lea.vmem %s0, %s246
      %s248 = smul.u32 2, %s21
      %s249 = smul.u32 2, %s21
      %p250 = scmp.lt.s32.totalorder %s20, 1
      %s251 = scalar_select %p250, %s20, 1
      %p252 = scmp.lt.s32.totalorder %s249, 1
      %s253 = scalar_select %p252, %s249, 1
      %s254 = smul.addr %s251, 2
      %s255 = sadd.s32 %s253, %s254
      %s256 = scalar_lea.vmem %s1, %s255
      %s257 = smul.u32 2, %s21
      %p258 = scmp.lt.s32.totalorder %s20, 1
      %s259 = scalar_select %p258, %s20, 1
      %s260 = scalar_lea.vmem %s3, %s259
      %p261 = scmp.lt.s32.totalorder %s20, 1
      %s262 = scalar_select %p261, %s20, 1
      %s263 = scalar_lea.vmem %s4, %s262
      %p264 = scmp.eq.s32.totalorder %s21, 0
      // Predicated region
      $region33: #{weighted_cross_entropy_loss.1} parent=31 // pred_check
        %p265 = pneg %p264
      $region34: #{weighted_cross_entropy_loss.1} parent=31 // pred_check_branch
        %267 = sbr.rel (%p265) target = $region36
      $region35: #{weighted_cross_entropy_loss.1} parent=31 // pred_region
        %v268 = vlaneseq
        %vm269 = vcmp.ge.s32.totalorder %v268, 0
        %vm270 = vcmp.lt.s32.totalorder %v268, 256
        %vm271 = vmand %vm269, %vm270
        %272 = vst.msk [vmem:[#allocation2] sm:$0x3] %vm271, 0.0
        %273 = vst.msk [vmem:[#allocation3] sm:$0x3] %vm271, 0.0
      $region36: #{weighted_cross_entropy_loss.1} parent=31 // pred_fallthru
        _
      %v274 = vld [vmem:[%s247] sm:$0xff]
      %v275 = vld [vmem:[%s256] sm:$0x3]
      %v276 = vld [vmem:[%s2] sm:$0xf]
      %v277 = vlaneseq
      %v278 = vand.u32 %v277, 127
      %v279 = vadd.s32 %v278, 128
      %s280 = smul.u32 %s21, 256
      %v281 = vstv %s280
      %v282 = vadd.s32 %v278, %v281
      %v283 = vadd.s32 %v279, %v281
      %vm284 = vcmp.lt.s32.totalorder %v282, 256
      %vm285 = vcmp.lt.s32.totalorder %v283, 256
      %v287 = vcombine.high %v274, %v274
      %vm289 = vcmask 1043456
      %v290 = vsel %vm289, %v274, -inf
      %v291 = vrot.slane %v290, 4
      %v292 = vmax.f32 %v290, %v291
      %v293 = vrot.slane %v292, 2
      %v294 = vmax.f32 %v292, %v293
      %v295 = vrot.slane %v294, 1
      %v296 = vmax.f32 %v294, %v295
      %v297 = vsel %vm289, %v287, -inf
      %v298 = vrot.slane %v297, 4
      %v299 = vmax.f32 %v297, %v298
      %v300 = vrot.slane %v299, 2
      %v301 = vmax.f32 %v299, %v300
      %v302 = vrot.slane %v301, 1
      %v303 = vmax.f32 %v301, %v302
      %v306 = vcombine.low %v296, %v303
      %v308 = vsub.f32 %v274, %v306
      %v309 = vmul.f32 %v308, 1.442695
      %v310 = vpow.pop %v309
      %v312 = vcombine.high %v310, %v310
      %v314 = vsel %vm289, %v310, 0.0
      %v315 = vrot.slane %v314, 4
      %v316 = vadd.f32 %v314, %v315
      %v317 = vrot.slane %v316, 2
      %v318 = vadd.f32 %v316, %v317
      %v319 = vrot.slane %v318, 1
      %v320 = vadd.f32 %v318, %v319
      %v321 = vsel %vm289, %v312, 0.0
      %v322 = vrot.slane %v321, 4
      %v323 = vadd.f32 %v321, %v322
      %v324 = vrot.slane %v323, 2
      %v325 = vadd.f32 %v323, %v324
      %v326 = vrot.slane %v325, 1
      %v327 = vadd.f32 %v325, %v326
      %v328 = vlog2.pop %v320
      %v329 = vmul.f32 %v328, 0.6931472
      %v330 = vlog2.pop %v327
      %v331 = vmul.f32 %v330, 0.6931472
      %v332 = vadd.f32 %v296, %v329
      %v333 = vadd.f32 %v303, %v331
      %v334 = vlaneseq
      %v335 = vshrl.u32 %v334, 7
      %v336 = vlaneseq
      %v337 = vshrl.u32 %v336, 7
      %v338 = vsub.s32 0, %v337
      %v339 = vrot.slane %v275, %v338
      %v340 = vlaneseq
      %v341 = vshrl.u32 %v340, 7
      %v342 = vsub.s32 1, %v341
      %v343 = vrot.slane %v275, %v342
      %vm344 = vcmp.eq.s32.totalorder %v335, %v339
      %vm345 = vcmp.eq.s32.totalorder %v335, %v343
      %v346 = vsel %vm344, 1, 0
      %v347 = vsel %vm345, 1, 0
      %v348 = vcvt.s32.f32 %v346
      %v349 = vcvt.s32.f32 %v347
      %v352 = vcombine.low %v348, %v349
      %v354 = vmul.f32 %v274, %v352
      %v356 = vcombine.high %v354, %v354
      %v358 = vsel %vm289, %v354, 0.0
      %v359 = vrot.slane %v358, 4
      %v360 = vadd.f32 %v358, %v359
      %v361 = vrot.slane %v360, 2
      %v362 = vadd.f32 %v360, %v361
      %v363 = vrot.slane %v362, 1
      %v364 = vadd.f32 %v362, %v363
      %v365 = vsel %vm289, %v356, 0.0
      %v366 = vrot.slane %v365, 4
      %v367 = vadd.f32 %v365, %v366
      %v368 = vrot.slane %v367, 2
      %v369 = vadd.f32 %v367, %v368
      %v370 = vrot.slane %v369, 1
      %v371 = vadd.f32 %v369, %v370
      %373 = vset.pattern.permute.xlu0 0
      %374 = vperm.xlu0 %373, %v276
      %v375 = vpop.permute.xlu0 %374
      %v377 = vmul.f32 %v375, %v348
      %v378 = vmul.f32 %v375, %v349
      %v379 = vsel %vm289, %v377, 0.0
      %v380 = vrot.slane %v379, 4
      %v381 = vadd.f32 %v379, %v380
      %v382 = vrot.slane %v381, 2
      %v383 = vadd.f32 %v381, %v382
      %v384 = vrot.slane %v383, 1
      %v385 = vadd.f32 %v383, %v384
      %v386 = vsel %vm289, %v378, 0.0
      %v387 = vrot.slane %v386, 4
      %v388 = vadd.f32 %v386, %v387
      %v389 = vrot.slane %v388, 2
      %v390 = vadd.f32 %v388, %v389
      %v391 = vrot.slane %v390, 1
      %v392 = vadd.f32 %v390, %v391
      %v393 = vsel %vm284, %v385, 0.0
      %v394 = vsel %vm285, %v392, 0.0
      %v395 = vsub.f32 %v332, %v364
      %v396 = vsub.f32 %v333, %v371
      %v397 = vmul.f32 %v393, %v395
      %v398 = vmul.f32 %v394, %v396
      %v399 = vsel %vm284, %v397, 0.0
      %v400 = vsel %vm285, %v398, 0.0
      %v401 = vld [vmem:[#allocation2] sm:$0x3]
      %v404 = vcombine.low %v399, %v400
      %v406 = vunpack.c.l.s4 1966171168
      %v407 = vunpack.c.0.s8 %v406
      %v408 = vlaneseq
      %v409 = vshrl.u32 %v408, 7
      %v410 = vsub.s32 %v407, %v409
      %v411 = vrot.slane %v404, %v410
      %v413 = vunpack.c.l.s4 1966171168
      %v414 = vunpack.c.0.s8 %v413
      %v415 = vlaneseq
      %v416 = vshrl.u32 %v415, 7
      %v417 = vsub.s32 %v414, %v416
      %v418 = vrot.slane %v411, %v417
      %v420 = vadd.f32 %v401, %v418
      %v421 = vlaneseq
      %vm422 = vcmp.ge.s32.totalorder %v421, 0
      %vm423 = vcmp.lt.s32.totalorder %v421, 256
      %vm424 = vmand %vm422, %vm423
      %425 = vst.msk [vmem:[#allocation2] sm:$0x3] %vm424, %v420
      %v426 = vld [vmem:[#allocation3] sm:$0x3]
      %v429 = vcombine.low %v393, %v394
      %v431 = vunpack.c.l.s4 1966171168
      %v432 = vunpack.c.0.s8 %v431
      %v433 = vlaneseq
      %v434 = vshrl.u32 %v433, 7
      %v435 = vsub.s32 %v432, %v434
      %v436 = vrot.slane %v429, %v435
      %v438 = vunpack.c.l.s4 1966171168
      %v439 = vunpack.c.0.s8 %v438
      %v440 = vlaneseq
      %v441 = vshrl.u32 %v440, 7
      %v442 = vsub.s32 %v439, %v441
      %v443 = vrot.slane %v436, %v442
      %v445 = vadd.f32 %v426, %v443
      %446 = vst.msk [vmem:[#allocation3] sm:$0x3] %vm424, %v445
      // Predicated region
      $region37: #{weighted_cross_entropy_loss.1} parent=31 // pred_check
        %p447 = pneg %p264
      $region38: #{weighted_cross_entropy_loss.1} parent=31 // pred_check_branch
        %449 = sbr.rel (%p447) target = $region40
      $region39: #{weighted_cross_entropy_loss.1} parent=31 // pred_region
        %v450 = vld [vmem:[#allocation2] sm:$0x3]
        %v452 = vlaneseq
        %v453 = vshrl.u32 %v452, 7
        %v454 = vsub.s32 0, %v453
        %v455 = vrot.slane %v450, %v454
        %v456 = vlaneseq
        %v457 = vshrl.u32 %v456, 7
        %v458 = vsub.s32 1, %v457
        %v459 = vrot.slane %v450, %v458
        %vm462 = vcmask 1040384
        %v463 = vsel %vm462, %v455, 0.0
        %v464 = vsel %vm462, %v459, 0.0
        %v465 = vadd.f32 %v463, %v464
        %466 = vadd.xlane.f32.xlu0 %v465
        %v467 = vpop.xlane.xlu0 %466
        %v468 = vrot.slane %v467, 4
        %v469 = vadd.f32 %v467, %v468
        %v470 = vrot.slane %v469, 2
        %v471 = vadd.f32 %v469, %v470
        %v472 = vrot.slane %v471, 1
        %v473 = vadd.f32 %v471, %v472
        %s474 = vtos %v473
        %v475 = vstv %s474
        %vm476 = vcmask 0
        %477 = vst.msk [vmem:[%s260] sm:$0x1] %vm476, %v475
        %v478 = vld [vmem:[#allocation3] sm:$0x3]
        %v480 = vlaneseq
        %v481 = vshrl.u32 %v480, 7
        %v482 = vsub.s32 0, %v481
        %v483 = vrot.slane %v478, %v482
        %v484 = vlaneseq
        %v485 = vshrl.u32 %v484, 7
        %v486 = vsub.s32 1, %v485
        %v487 = vrot.slane %v478, %v486
        %v490 = vsel %vm462, %v483, 0.0
        %v491 = vsel %vm462, %v487, 0.0
        %v492 = vadd.f32 %v490, %v491
        %493 = vadd.xlane.f32.xlu0 %v492
        %v494 = vpop.xlane.xlu0 %493
        %v495 = vrot.slane %v494, 4
        %v496 = vadd.f32 %v494, %v495
        %v497 = vrot.slane %v496, 2
        %v498 = vadd.f32 %v496, %v497
        %v499 = vrot.slane %v498, 1
        %v500 = vadd.f32 %v498, %v499
        %s501 = vtos %v500
        %v502 = vstv %s501
        %503 = vst.msk [vmem:[%s263] sm:$0x1] %vm476, %v502
      $region40: #{weighted_cross_entropy_loss.1} parent=31 // pred_fallthru
        _
      %p504 = scmp.lt.s32.totalorder %s20, 1
      %s505 = scalar_select %p504, %s20, 1
      %s506 = scalar_lea.vmem %s3, %s505
      %p507 = scmp.lt.s32.totalorder %s20, 1
      %s508 = scalar_select %p507, %s20, 1
      %s509 = scalar_lea.vmem %s4, %s508
      // Predicated region
      $region41: #{weighted_cross_entropy_loss.1} parent=31 // pred_check
        %p510 = pneg %p123
      $region42: #{weighted_cross_entropy_loss.1} parent=31 // pred_check_branch
        %512 = sbr.rel (%p510) target = $region44
      $region43: #{weighted_cross_entropy_loss.1} parent=31 // pred_region
        _
      $region44: #{weighted_cross_entropy_loss.1} parent=31 // pred_fallthru
        _
      // Predicated region
      $region45: #{weighted_cross_entropy_loss.1} parent=31 // pred_check
        %p513 = pneg %p149
      $region46: #{weighted_cross_entropy_loss.1} parent=31 // pred_check_branch
        %515 = sbr.rel (%p513) target = $region48
      $region47: #{weighted_cross_entropy_loss.1} parent=31 // pred_region
        _
      $region48: #{weighted_cross_entropy_loss.1} parent=31 // pred_fallthru
        _
    $region32: #{weighted_cross_entropy_loss.1} parent=5 // pred_fallthru
      _
    %p516 = scmp.le.s32.totalorder 2, %s11
    // Predicated region
    $region49: #{weighted_cross_entropy_loss.1} parent=5 // pred_check
      %p517 = pneg %p516
    $region50: #{weighted_cross_entropy_loss.1} parent=5 // pred_check_branch
      %519 = sbr.rel (%p517) target = $region52
    $region51: #{weighted_cross_entropy_loss.1} parent=5 // pred_region
      %s520 = ssub.s32 %s11, 2
      // Predicated region
      $region53: #{weighted_cross_entropy_loss.1} parent=51 // pred_check
        %p521 = pneg %p129
      $region54: #{weighted_cross_entropy_loss.1} parent=51 // pred_check_branch
        %523 = sbr.rel (%p521) target = $region56
      $region55: #{weighted_cross_entropy_loss.1} parent=51 // pred_region
        %p524 = scmp.lt.s32.totalorder %s22, 1
        %s525 = scalar_select %p524, %s22, 1
        %s526 = scalar_lea.vmem %s3, %s525
      $region56: #{weighted_cross_entropy_loss.1} parent=51 // pred_fallthru
        _
      // Predicated region
      $region57: #{weighted_cross_entropy_loss.1} parent=51 // pred_check
        %p527 = pneg %p155
      $region58: #{weighted_cross_entropy_loss.1} parent=51 // pred_check_branch
        %529 = sbr.rel (%p527) target = $region60
      $region59: #{weighted_cross_entropy_loss.1} parent=51 // pred_region
        %p530 = scmp.lt.s32.totalorder %s22, 1
        %s531 = scalar_select %p530, %s22, 1
        %s532 = scalar_lea.vmem %s4, %s531
      $region60: #{weighted_cross_entropy_loss.1} parent=51 // pred_fallthru
        _
    $region52: #{weighted_cross_entropy_loss.1} parent=5 // pred_fallthru
      _
  $region6: #{weighted_cross_entropy_loss.1} parent=0 // loop_footer
    %s15 = sadd.s32 1, %s11
  $region7: #{weighted_cross_entropy_loss.1} parent=0 // loop_footer_branch
    %10 = sbr.rel target = $region3
  $region8: #{weighted_cross_entropy_loss.1} parent=0 // loop_exit
    _

</llo_original>
